<compile_context>
chip_gen: v5e
topology: v5e:2x2
jax: 0.10.0
libtpu: 0.0.40
codegen_flags: <defaults>
</compile_context>

<pallas_src>
import jax
import jax.numpy as jnp
from jax.experimental import pallas as pl
from jax.experimental.pallas import tpu as pltpu


# ---------------------------------------------------------------------------
# Kernel: fused chain of (matmul + bias + ReLU) layers over a tile of rows.
# ---------------------------------------------------------------------------
def _make_fused_kernel(num_layers):
    def kernel(*refs):
        # refs = (x_ref, w_1..w_n, b_1..b_n, o_ref)
        x_ref = refs[0]
        w_refs = refs[1:1 + num_layers]
        b_refs = refs[1 + num_layers:1 + 2 * num_layers]
        o_ref = refs[1 + 2 * num_layers]

        h = x_ref[...]
        for w_ref, b_ref in zip(w_refs, b_refs):
            h = jnp.dot(h, w_ref[...], preferred_element_type=jnp.float32)
            h = jnp.maximum(h + b_ref[...], 0.0)   # bias + ReLU
        o_ref[...] = h.astype(o_ref.dtype)

    return kernel


# ---------------------------------------------------------------------------
# Host-side parameter folding: BN (eval) -> affine folded into the next conv.
# ---------------------------------------------------------------------------
def _fold_branch(params, eps=1e-3):
    """Returns ([W_i of shape (C_in_i, C_out_i)], [b_i of shape (1, C_out_i)])."""
    hp = jax.lax.Precision.HIGHEST
    gamma, beta, mean, var = params["bn_in"]
    scale = gamma / jnp.sqrt(var + eps)
    shift = beta - mean * scale

    ws, bs = [], []
    n = len(params["layers"])
    for idx, layer in enumerate(params["layers"]):
        W = layer["w"][:, :, 0]                                   # (C_out, C_in)
        W_fold = W * scale[None, :]                               # fold input affine
        b_fold = jnp.einsum("oc,c->o", W, shift, precision=hp) + layer["b"]
        ws.append(jnp.transpose(W_fold))                          # (C_in, C_out)
        bs.append(b_fold.reshape(1, -1))
        if idx < n - 1:                                           # this layer has its own BN
            g, bt, m, v = layer["bn"]
            scale = g / jnp.sqrt(v + eps)
            shift = bt - m * scale
    return ws, bs


# ---------------------------------------------------------------------------
# One branch: (N, L, C_in) -> (N, L, C_out), fully fused in one pallas_call.
# ---------------------------------------------------------------------------
def _fused_branch(x_nlc, ws, bs, tm=1024):
    N, L, C_in = x_nlc.shape
    C_out = ws[-1].shape[1]
    M = N * L

    x2d = x_nlc.reshape(M, C_in)                                  # free (no transpose)

    # Row tile: big by default, clamped + rounded so (8,128) rules are satisfied.
    tm_eff = min(tm, pl.cdiv(M, 8) * 8)
    m_pad = pl.cdiv(M, tm_eff) * tm_eff
    if m_pad != M:
        x2d = jnp.pad(x2d, ((0, m_pad - M), (0, 0)))              # masked tail via padding
    grid = m_pad // tm_eff

    num_layers = len(ws)
    kernel = _make_fused_kernel(num_layers)

    in_specs = [pl.BlockSpec((tm_eff, C_in), lambda i: (i, 0))]
    for w in ws:
        in_specs.append(pl.BlockSpec(w.shape, lambda i: (0, 0)))  # tiny, stays resident
    for b in bs:
        in_specs.append(pl.BlockSpec(b.shape, lambda i: (0, 0)))

    out2d = pl.pallas_call(
        kernel,
        out_shape=jax.ShapeDtypeStruct((m_pad, C_out), x_nlc.dtype),
        grid_spec=pltpu.PrefetchScalarGridSpec(
            num_scalar_prefetch=0,
            grid=(grid,),
            in_specs=in_specs,
            out_specs=pl.BlockSpec((tm_eff, C_out), lambda i: (i, 0)),
        ),
        compiler_params=pltpu.CompilerParams(
            dimension_semantics=("parallel",)),
    )(x2d, *ws, *bs)

    return out2d[:M].reshape(N, L, C_out)


# ---------------------------------------------------------------------------
# Full InputProcess forward (eval mode).
# ---------------------------------------------------------------------------
def input_process_forward(cpf, npf, vtx, cpf_params, npf_params, vtx_params,
                          eps=1e-3, tm=1024):
    cpf_w, cpf_b = _fold_branch(cpf_params, eps)
    npf_w, npf_b = _fold_branch(npf_params, eps)
    vtx_w, vtx_b = _fold_branch(vtx_params, eps)
    cpf_out = _fused_branch(cpf, cpf_w, cpf_b, tm=tm)
    npf_out = _fused_branch(npf, npf_w, npf_b, tm=tm)
    vtx_out = _fused_branch(vtx, vtx_w, vtx_b, tm=tm)
    return cpf_out, npf_out, vtx_out


# ---------------------------------------------------------------------------
# Pure-JAX (unfolded) reference mirroring the PyTorch eval-mode forward.
# ---------------------------------------------------------------------------
def _reference_branch(x_nlc, params, eps=1e-3):
    hp = jax.lax.Precision.HIGHEST
    g, bt, m, v = params["bn_in"]
    h = (x_nlc - m) / jnp.sqrt(v + eps) * g + bt
    n = len(params["layers"])
    for idx, layer in enumerate(params["layers"]):
        W = layer["w"][:, :, 0]                                   # (C_out, C_in)
        h = jnp.einsum("nlc,oc->nlo", h, W, precision=hp) + layer["b"]
        h = jnp.maximum(h, 0.0)
        if idx < n - 1:
            g, bt, m, v = layer["bn"]
            h = (h - m) / jnp.sqrt(v + eps) * g + bt
        # Dropout is identity in eval mode.
    return h


# ---------------------------------------------------------------------------
# Deterministic parameter construction.
# ---------------------------------------------------------------------------
def _make_bn(key, c):
    k1, k2, k3, k4 = jax.random.split(key, 4)
    gamma = 1.0 + 0.1 * jax.random.normal(k1, (c,), jnp.float32)
    beta = 0.1 * jax.random.normal(k2, (c,), jnp.float32)
    mean = 0.1 * jax.random.normal(k3, (c,), jnp.float32)
    var = jnp.abs(1.0 + 0.1 * jax.random.normal(k4, (c,), jnp.float32))
    return gamma, beta, mean, var


def _make_branch_params(key, dims):
    keys = jax.random.split(key, 2 * len(dims) + 1)
    params = {"bn_in": _make_bn(keys[0], dims[0]), "layers": []}
    n = len(dims) - 1
    for i in range(1, len(dims)):
        kw, kb = keys[2 * i - 1], keys[2 * i]
        w = 0.1 * jax.random.normal(kw, (dims[i], dims[i - 1], 1), jnp.float32)
        b = 0.1 * jax.random.normal(kb, (dims[i],), jnp.float32)
        bn = _make_bn(jax.random.fold_in(key, 1000 + i), dims[i]) if i < n else None
        params["layers"].append({"w": w, "b": b, "bn": bn})
    return params


if __name__ == "__main__":
    key = jax.random.PRNGKey(0)
    k_cpf, k_npf, k_vtx, kx1, kx2, kx3 = jax.random.split(key, 6)

    # Channel stacks from the module.
    cpf_dims = [16, 64, 32, 32, 8]
    npf_dims = [6, 32, 16, 4]
    vtx_dims = [12, 64, 32, 32, 8]

    cpf_params = _make_branch_params(k_cpf, cpf_dims)
    npf_params = _make_branch_params(k_npf, npf_dims)
    vtx_params = _make_branch_params(k_vtx, vtx_dims)

    # Inputs are (N, L, C) exactly as the PyTorch forward expects (it transposes
    # internally).  vtx uses L=5 to exercise the padded row-tail path.
    N = 2
    cpf = jax.random.normal(kx1, (N, 16, 16), jnp.float32)
    npf = jax.random.normal(kx2, (N, 8, 6), jnp.float32)
    vtx = jax.random.normal(kx3, (N, 5, 12), jnp.float32)

    cpf_o, npf_o, vtx_o = input_process_forward(
        cpf, npf, vtx, cpf_params, npf_params, vtx_params, eps=1e-3)
    cpf_o, npf_o, vtx_o = jax.block_until_ready((cpf_o, npf_o, vtx_o))

    cpf_r = _reference_branch(cpf, cpf_params)
    npf_r = _reference_branch(npf, npf_params)
    vtx_r = _reference_branch(vtx, vtx_params)

    assert cpf_o.shape == (N, 16, 8)
    assert npf_o.shape == (N, 8, 4)
    assert vtx_o.shape == (N, 5, 8)
    for got, want in ((cpf_o, cpf_r), (npf_o, npf_r), (vtx_o, vtx_r)):
        err = float(jnp.max(jnp.abs(got - want)))
        assert jnp.allclose(got, want, atol=1e-3, rtol=1e-3), err

    print("KERNEL_OK")
</pallas_src>

<mosaic_0001>
module attributes {stable_mosaic.version = 11 : i64} {
  func.func @kernel(%arg0: i32, %arg1: memref<32x16xf32, #tpu.memory_space<vmem>>, %arg2: memref<16x64xf32, #tpu.memory_space<vmem>>, %arg3: memref<64x32xf32, #tpu.memory_space<vmem>>, %arg4: memref<32x32xf32, #tpu.memory_space<vmem>>, %arg5: memref<32x8xf32, #tpu.memory_space<vmem>>, %arg6: memref<1x64xf32, #tpu.memory_space<vmem>>, %arg7: memref<1x32xf32, #tpu.memory_space<vmem>>, %arg8: memref<1x32xf32, #tpu.memory_space<vmem>>, %arg9: memref<1x8xf32, #tpu.memory_space<vmem>>, %arg10: memref<32x8xf32, #tpu.memory_space<vmem>>) attributes {dimension_semantics = [#tpu.dimension_semantics<parallel>], iteration_bounds = array<i64: 1>, scalar_prefetch = 0 : i64, scratch_operands = 0 : i64, tpu.core_type = #tpu.core_type<tc>, window_params = [{transform_indices = @transform_0, window_bounds = array<i64: 32, 16>}, {pipeline_mode = #tpu.pipeline_mode<synchronous>, transform_indices = @transform_1, window_bounds = array<i64: 16, 64>}, {pipeline_mode = #tpu.pipeline_mode<synchronous>, transform_indices = @transform_2, window_bounds = array<i64: 64, 32>}, {pipeline_mode = #tpu.pipeline_mode<synchronous>, transform_indices = @transform_3, window_bounds = array<i64: 32, 32>}, {pipeline_mode = #tpu.pipeline_mode<synchronous>, transform_indices = @transform_4, window_bounds = array<i64: 32, 8>}, {pipeline_mode = #tpu.pipeline_mode<synchronous>, transform_indices = @transform_5, window_bounds = array<i64: 1, 64>}, {pipeline_mode = #tpu.pipeline_mode<synchronous>, transform_indices = @transform_6, window_bounds = array<i64: 1, 32>}, {pipeline_mode = #tpu.pipeline_mode<synchronous>, transform_indices = @transform_7, window_bounds = array<i64: 1, 32>}, {pipeline_mode = #tpu.pipeline_mode<synchronous>, transform_indices = @transform_8, window_bounds = array<i64: 1, 8>}, {transform_indices = @transform_9, window_bounds = array<i64: 32, 8>}]} {
    %c0 = arith.constant 0 : index
    %c0_0 = arith.constant 0 : index
    %0 = vector.load %arg1[%c0, %c0_0] : memref<32x16xf32, #tpu.memory_space<vmem>>, vector<32x16xf32>
    %c0_1 = arith.constant 0 : index
    %c0_2 = arith.constant 0 : index
    %1 = vector.load %arg2[%c0_1, %c0_2] : memref<16x64xf32, #tpu.memory_space<vmem>>, vector<16x64xf32>
    %cst = arith.constant dense<0.000000e+00> : vector<32x64xf32>
    %2 = tpu.matmul %0, %1, %cst {dimension_numbers = #tpu.dot_dimension_numbers<[1], [0], [0], [1], [0, 0, 1, 1], [], []>} : vector<32x16xf32>, vector<16x64xf32>, vector<32x64xf32> -> vector<32x64xf32>
    %c0_3 = arith.constant 0 : index
    %c0_4 = arith.constant 0 : index
    %3 = vector.load %arg6[%c0_3, %c0_4] : memref<1x64xf32, #tpu.memory_space<vmem>>, vector<1x64xf32>
    %4 = vector.broadcast %3 : vector<1x64xf32> to vector<32x64xf32>
    %5 = arith.addf %2, %4 : vector<32x64xf32>
    %cst_5 = arith.constant 0.000000e+00 : f32
    %6 = vector.broadcast %cst_5 : f32 to vector<32x64xf32>
    %7 = arith.maximumf %5, %6 : vector<32x64xf32>
    %c0_6 = arith.constant 0 : index
    %c0_7 = arith.constant 0 : index
    %8 = vector.load %arg3[%c0_6, %c0_7] : memref<64x32xf32, #tpu.memory_space<vmem>>, vector<64x32xf32>
    %cst_8 = arith.constant dense<0.000000e+00> : vector<32x32xf32>
    %9 = tpu.matmul %7, %8, %cst_8 {dimension_numbers = #tpu.dot_dimension_numbers<[1], [0], [0], [1], [0, 0, 1, 1], [], []>} : vector<32x64xf32>, vector<64x32xf32>, vector<32x32xf32> -> vector<32x32xf32>
    %c0_9 = arith.constant 0 : index
    %c0_10 = arith.constant 0 : index
    %10 = vector.load %arg7[%c0_9, %c0_10] : memref<1x32xf32, #tpu.memory_space<vmem>>, vector<1x32xf32>
    %11 = vector.broadcast %10 : vector<1x32xf32> to vector<32x32xf32>
    %12 = arith.addf %9, %11 : vector<32x32xf32>
    %cst_11 = arith.constant 0.000000e+00 : f32
    %13 = vector.broadcast %cst_11 : f32 to vector<32x32xf32>
    %14 = arith.maximumf %12, %13 : vector<32x32xf32>
    %c0_12 = arith.constant 0 : index
    %c0_13 = arith.constant 0 : index
    %15 = vector.load %arg4[%c0_12, %c0_13] : memref<32x32xf32, #tpu.memory_space<vmem>>, vector<32x32xf32>
    %cst_14 = arith.constant dense<0.000000e+00> : vector<32x32xf32>
    %16 = tpu.matmul %14, %15, %cst_14 {dimension_numbers = #tpu.dot_dimension_numbers<[1], [0], [0], [1], [0, 0, 1, 1], [], []>} : vector<32x32xf32>, vector<32x32xf32>, vector<32x32xf32> -> vector<32x32xf32>
    %c0_15 = arith.constant 0 : index
    %c0_16 = arith.constant 0 : index
    %17 = vector.load %arg8[%c0_15, %c0_16] : memref<1x32xf32, #tpu.memory_space<vmem>>, vector<1x32xf32>
    %18 = vector.broadcast %17 : vector<1x32xf32> to vector<32x32xf32>
    %19 = arith.addf %16, %18 : vector<32x32xf32>
    %cst_17 = arith.constant 0.000000e+00 : f32
    %20 = vector.broadcast %cst_17 : f32 to vector<32x32xf32>
    %21 = arith.maximumf %19, %20 : vector<32x32xf32>
    %c0_18 = arith.constant 0 : index
    %c0_19 = arith.constant 0 : index
    %22 = vector.load %arg5[%c0_18, %c0_19] : memref<32x8xf32, #tpu.memory_space<vmem>>, vector<32x8xf32>
    %cst_20 = arith.constant dense<0.000000e+00> : vector<32x8xf32>
    %23 = tpu.matmul %21, %22, %cst_20 {dimension_numbers = #tpu.dot_dimension_numbers<[1], [0], [0], [1], [0, 0, 1, 1], [], []>} : vector<32x32xf32>, vector<32x8xf32>, vector<32x8xf32> -> vector<32x8xf32>
    %c0_21 = arith.constant 0 : index
    %c0_22 = arith.constant 0 : index
    %24 = vector.load %arg9[%c0_21, %c0_22] : memref<1x8xf32, #tpu.memory_space<vmem>>, vector<1x8xf32>
    %25 = vector.broadcast %24 : vector<1x8xf32> to vector<32x8xf32>
    %26 = arith.addf %23, %25 : vector<32x8xf32>
    %cst_23 = arith.constant 0.000000e+00 : f32
    %27 = vector.broadcast %cst_23 : f32 to vector<32x8xf32>
    %28 = arith.maximumf %26, %27 : vector<32x8xf32>
    %c0_24 = arith.constant 0 : index
    %c0_25 = arith.constant 0 : index
    %29 = vector.load %arg10[%c0_24, %c0_25] : memref<32x8xf32, #tpu.memory_space<vmem>>, vector<32x8xf32>
    tpu.vector_store %arg10[%c0_24, %c0_25], %28 {strides = array<i32>} : memref<32x8xf32, #tpu.memory_space<vmem>>, vector<32x8xf32>,
    return
  }
  func.func @transform_0(%arg0: i32) -> (i32, i32) {
    %c0_i32 = arith.constant 0 : i32
    %c0_i32_0 = arith.constant 0 : i32
    return %arg0, %c0_i32 : i32, i32
  }
  func.func @transform_1(%arg0: i32) -> (i32, i32) {
    %c0_i32 = arith.constant 0 : i32
    %c0_i32_0 = arith.constant 0 : i32
    %c0_i32_1 = arith.constant 0 : i32
    return %c0_i32, %c0_i32_0 : i32, i32
  }
  func.func @transform_2(%arg0: i32) -> (i32, i32) {
    %c0_i32 = arith.constant 0 : i32
    %c0_i32_0 = arith.constant 0 : i32
    %c0_i32_1 = arith.constant 0 : i32
    return %c0_i32, %c0_i32_0 : i32, i32
  }
  func.func @transform_3(%arg0: i32) -> (i32, i32) {
    %c0_i32 = arith.constant 0 : i32
    %c0_i32_0 = arith.constant 0 : i32
    %c0_i32_1 = arith.constant 0 : i32
    return %c0_i32, %c0_i32_0 : i32, i32
  }
  func.func @transform_4(%arg0: i32) -> (i32, i32) {
    %c0_i32 = arith.constant 0 : i32
    %c0_i32_0 = arith.constant 0 : i32
    %c0_i32_1 = arith.constant 0 : i32
    return %c0_i32, %c0_i32_0 : i32, i32
  }
  func.func @transform_5(%arg0: i32) -> (i32, i32) {
    %c0_i32 = arith.constant 0 : i32
    %c0_i32_0 = arith.constant 0 : i32
    %c0_i32_1 = arith.constant 0 : i32
    return %c0_i32, %c0_i32_0 : i32, i32
  }
  func.func @transform_6(%arg0: i32) -> (i32, i32) {
    %c0_i32 = arith.constant 0 : i32
    %c0_i32_0 = arith.constant 0 : i32
    %c0_i32_1 = arith.constant 0 : i32
    return %c0_i32, %c0_i32_0 : i32, i32
  }
  func.func @transform_7(%arg0: i32) -> (i32, i32) {
    %c0_i32 = arith.constant 0 : i32
    %c0_i32_0 = arith.constant 0 : i32
    %c0_i32_1 = arith.constant 0 : i32
    return %c0_i32, %c0_i32_0 : i32, i32
  }
  func.func @transform_8(%arg0: i32) -> (i32, i32) {
    %c0_i32 = arith.constant 0 : i32
    %c0_i32_0 = arith.constant 0 : i32
    %c0_i32_1 = arith.constant 0 : i32
    return %c0_i32, %c0_i32_0 : i32, i32
  }
  func.func @transform_9(%arg0: i32) -> (i32, i32) {
    %c0_i32 = arith.constant 0 : i32
    %c0_i32_0 = arith.constant 0 : i32
    return %arg0, %c0_i32 : i32, i32
  }
}

</mosaic_0001>

<llo_original>
// kernel: tpu_custom_call.1
$region0: #{tpu_custom_call.1}
  #allocation0 [shape = 'u32[]', space=smem, size = 0x4, offset = 0x4, fixed_abs, tag = 'smem constant byte address 0x4 - core index']
  #allocation1 [shape = 'u32[72,128]{1,0:T(1,128)}', space=vmem, size = 0x9000, scoped, tag = 'internal scratch']
  %s0 = inlined_call_operand.vmem [shape: f32[32,16], index: 0, kind: input, shape index: {}]
  %s1 = inlined_call_operand.vmem [shape: f32[16,64], index: 1, kind: input, shape index: {}]
  %s2 = inlined_call_operand.vmem [shape: f32[64,32], index: 2, kind: input, shape index: {}]
  %s3 = inlined_call_operand.vmem [shape: f32[32,32], index: 3, kind: input, shape index: {}]
  %s4 = inlined_call_operand.vmem [shape: f32[32,8], index: 4, kind: input, shape index: {}]
  %s5 = inlined_call_operand.vmem [shape: f32[1,64], index: 5, kind: input, shape index: {}]
  %s6 = inlined_call_operand.vmem [shape: f32[1,32], index: 6, kind: input, shape index: {}]
  %s7 = inlined_call_operand.vmem [shape: f32[1,32], index: 7, kind: input, shape index: {}]
  %s8 = inlined_call_operand.vmem [shape: f32[1,8], index: 8, kind: input, shape index: {}]
  %s9 = inlined_call_operand.vmem [shape: f32[32,8], index: 9, kind: output, shape index: {}]
  %s10 = sld [smem:[#allocation0]]
  $region46: #{tpu_custom_call.1} parent=0
    _
  %s12 = ssub.s32 1, %s10
  %s13 = scalar_select 0, %s12, %s10
  // Predicated region
  $region2: #{tpu_custom_call.1} parent=0 // pred_check
    _
  $region3: #{tpu_custom_call.1} parent=0 // pred_check_branch
    %15 = sbr.rel (0) target = $region5
  $region4: #{tpu_custom_call.1} parent=0 // pred_region
    _
  $region5: #{tpu_custom_call.1} parent=0 // pred_fallthru
    _
  // Predicated region
  $region6: #{tpu_custom_call.1} parent=0 // pred_check
    _
  $region7: #{tpu_custom_call.1} parent=0 // pred_check_branch
    %17 = sbr.rel (0) target = $region9
  $region8: #{tpu_custom_call.1} parent=0 // pred_region
    _
  $region9: #{tpu_custom_call.1} parent=0 // pred_fallthru
    _
  // Predicated region
  $region10: #{tpu_custom_call.1} parent=0 // pred_check
    _
  $region11: #{tpu_custom_call.1} parent=0 // pred_check_branch
    %19 = sbr.rel (0) target = $region13
  $region12: #{tpu_custom_call.1} parent=0 // pred_region
    _
  $region13: #{tpu_custom_call.1} parent=0 // pred_fallthru
    _
  // Predicated region
  $region14: #{tpu_custom_call.1} parent=0 // pred_check
    _
  $region15: #{tpu_custom_call.1} parent=0 // pred_check_branch
    %21 = sbr.rel (0) target = $region17
  $region16: #{tpu_custom_call.1} parent=0 // pred_region
    _
  $region17: #{tpu_custom_call.1} parent=0 // pred_fallthru
    _
  // Predicated region
  $region18: #{tpu_custom_call.1} parent=0 // pred_check
    _
  $region19: #{tpu_custom_call.1} parent=0 // pred_check_branch
    %23 = sbr.rel (0) target = $region21
  $region20: #{tpu_custom_call.1} parent=0 // pred_region
    _
  $region21: #{tpu_custom_call.1} parent=0 // pred_fallthru
    _
  // Predicated region
  $region22: #{tpu_custom_call.1} parent=0 // pred_check
    _
  $region23: #{tpu_custom_call.1} parent=0 // pred_check_branch
    %25 = sbr.rel (0) target = $region25
  $region24: #{tpu_custom_call.1} parent=0 // pred_region
    _
  $region25: #{tpu_custom_call.1} parent=0 // pred_fallthru
    _
  // Predicated region
  $region26: #{tpu_custom_call.1} parent=0 // pred_check
    _
  $region27: #{tpu_custom_call.1} parent=0 // pred_check_branch
    %27 = sbr.rel (0) target = $region29
  $region28: #{tpu_custom_call.1} parent=0 // pred_region
    _
  $region29: #{tpu_custom_call.1} parent=0 // pred_fallthru
    _
  // Predicated region
  $region30: #{tpu_custom_call.1} parent=0 // pred_check
    _
  $region31: #{tpu_custom_call.1} parent=0 // pred_check_branch
    %29 = sbr.rel (0) target = $region33
  $region32: #{tpu_custom_call.1} parent=0 // pred_region
    _
  $region33: #{tpu_custom_call.1} parent=0 // pred_fallthru
    _
  // Predicated region
  $region34: #{tpu_custom_call.1} parent=0 // pred_check
    _
  $region35: #{tpu_custom_call.1} parent=0 // pred_check_branch
    %31 = sbr.rel (0) target = $region37
  $region36: #{tpu_custom_call.1} parent=0 // pred_region
    _
  $region37: #{tpu_custom_call.1} parent=0 // pred_fallthru
    _
  %v32 = vld [vmem:[%s0] sm:$0xff]
  %v33 = vld [vmem:[%s0 + $0x8] sm:$0xff]
  %v34 = vld [vmem:[%s0 + $0x10] sm:$0xff]
  %v35 = vld [vmem:[%s0 + $0x18] sm:$0xff]
  %v36 = vld [vmem:[%s1] sm:$0xff]
  %v37 = vld [vmem:[%s1 + $0x8] sm:$0xff]
  %v38 = vld [vmem:[%s5] sm:$0x1]
  %v40 = vperm.slane %v38, 0
  %vm42 = vcmask 130048
  %v44 = vsel %vm42, %v32, 0
  %v47 = vsel %vm42, %v33, 0
  %v50 = vsel %vm42, %v34, 0
  %v53 = vsel %vm42, %v35, 0
  %55 = vmatpush.msra.mxu0 0.0
  %56 = vmatpush.msra.mxu0 0.0
  %57 = vmatpush.msra.mxu0 0.0
  %58 = vmatpush.msra.mxu0 0.0
  %59 = vmatpush.msra.mxu0 0.0
  %60 = vmatpush.msra.mxu0 0.0
  %61 = vmatpush.msra.mxu0 0.0
  %62 = vmatpush.msra.mxu0 0.0
  %63 = vmatpush.msra.mxu0 0.0
  %64 = vmatpush.msra.mxu0 0.0
  %65 = vmatpush.msra.mxu0 0.0
  %66 = vmatpush.msra.mxu0 0.0
  %67 = vmatpush.msra.mxu0 0.0
  %68 = vmatpush.msra.mxu0 0.0
  %69 = vmatpush.msra.mxu0 %v37
  %70 = vmatpush.msra.mxu0 %v36
  %71 = vmatmul.f32.gmra.mxu0 %v44
  %v72 = vpop.f32.mrf.mxu0
  %v73 = vadd.f32 %v40, %v72
  %74 = vmatmul.f32.gmra.mxu0 %v47
  %v75 = vpop.f32.mrf.mxu0
  %v76 = vadd.f32 %v40, %v75
  %77 = vmatmul.f32.gmra.mxu0 %v50
  %v78 = vpop.f32.mrf.mxu0
  %v79 = vadd.f32 %v40, %v78
  %80 = vmatmul.f32.gmra.mxu0 %v53
  %v81 = vpop.f32.mrf.mxu0
  %v82 = vadd.f32 %v40, %v81
  %83 = vdwg.mxu0
  %v84 = vmax.f32 %v73, 0.0
  %v85 = vmax.f32 %v76, 0.0
  %v86 = vmax.f32 %v79, 0.0
  %v87 = vmax.f32 %v82, 0.0
  %v88 = vld [vmem:[%s2] sm:$0xff]
  %v89 = vld [vmem:[%s2 + $0x8] sm:$0xff]
  %v90 = vld [vmem:[%s2 + $0x10] sm:$0xff]
  %v91 = vld [vmem:[%s2 + $0x18] sm:$0xff]
  %v92 = vld [vmem:[%s2 + $0x20] sm:$0xff]
  %v93 = vld [vmem:[%s2 + $0x28] sm:$0xff]
  %v94 = vld [vmem:[%s2 + $0x30] sm:$0xff]
  %v95 = vld [vmem:[%s2 + $0x38] sm:$0xff]
  %v96 = vld [vmem:[%s6] sm:$0x1]
  %v98 = vperm.slane %v96, 0
  %vm100 = vcmask 523264
  %v102 = vsel %vm100, %v84, 0
  %v105 = vsel %vm100, %v85, 0
  %v108 = vsel %vm100, %v86, 0
  %v111 = vsel %vm100, %v87, 0
  %113 = vmatpush.msra.mxu0 0.0
  %114 = vmatpush.msra.mxu0 0.0
  %115 = vmatpush.msra.mxu0 0.0
  %116 = vmatpush.msra.mxu0 0.0
  %117 = vmatpush.msra.mxu0 0.0
  %118 = vmatpush.msra.mxu0 0.0
  %119 = vmatpush.msra.mxu0 0.0
  %120 = vmatpush.msra.mxu0 0.0
  %121 = vmatpush.msra.mxu0 %v95
  %122 = vmatpush.msra.mxu0 %v94
  %123 = vmatpush.msra.mxu0 %v93
  %124 = vmatpush.msra.mxu0 %v92
  %125 = vmatpush.msra.mxu0 %v91
  %126 = vmatpush.msra.mxu0 %v90
  %127 = vmatpush.msra.mxu0 %v89
  %128 = vmatpush.msra.mxu0 %v88
  %129 = vmatmul.f32.gmra.mxu0 %v102
  %v130 = vpop.f32.mrf.mxu0
  %v131 = vadd.f32 %v98, %v130
  %132 = vmatmul.f32.gmra.mxu0 %v105
  %v133 = vpop.f32.mrf.mxu0
  %v134 = vadd.f32 %v98, %v133
  %135 = vmatmul.f32.gmra.mxu0 %v108
  %v136 = vpop.f32.mrf.mxu0
  %v137 = vadd.f32 %v98, %v136
  %138 = vmatmul.f32.gmra.mxu0 %v111
  %v139 = vpop.f32.mrf.mxu0
  %v140 = vadd.f32 %v98, %v139
  %141 = vdwg.mxu0
  %v142 = vmax.f32 %v131, 0.0
  %v143 = vmax.f32 %v134, 0.0
  %v144 = vmax.f32 %v137, 0.0
  %v145 = vmax.f32 %v140, 0.0
  %v146 = vld [vmem:[%s3] sm:$0xff]
  %v147 = vld [vmem:[%s3 + $0x8] sm:$0xff]
  %v148 = vld [vmem:[%s3 + $0x10] sm:$0xff]
  %v149 = vld [vmem:[%s3 + $0x18] sm:$0xff]
  %v150 = vld [vmem:[%s7] sm:$0x1]
  %v152 = vperm.slane %v150, 0
  %vm154 = vcmask 261120
  %v156 = vsel %vm154, %v142, 0
  %v159 = vsel %vm154, %v143, 0
  %v162 = vsel %vm154, %v144, 0
  %v165 = vsel %vm154, %v145, 0
  %167 = vmatpush.msra.mxu0 0.0
  %168 = vmatpush.msra.mxu0 0.0
  %169 = vmatpush.msra.mxu0 0.0
  %170 = vmatpush.msra.mxu0 0.0
  %171 = vmatpush.msra.mxu0 0.0
  %172 = vmatpush.msra.mxu0 0.0
  %173 = vmatpush.msra.mxu0 0.0
  %174 = vmatpush.msra.mxu0 0.0
  %175 = vmatpush.msra.mxu0 0.0
  %176 = vmatpush.msra.mxu0 0.0
  %177 = vmatpush.msra.mxu0 0.0
  %178 = vmatpush.msra.mxu0 0.0
  %179 = vmatpush.msra.mxu0 %v149
  %180 = vmatpush.msra.mxu0 %v148
  %181 = vmatpush.msra.mxu0 %v147
  %182 = vmatpush.msra.mxu0 %v146
  %183 = vmatmul.f32.gmra.mxu0 %v156
  %v184 = vpop.f32.mrf.mxu0
  %v185 = vadd.f32 %v152, %v184
  %186 = vmatmul.f32.gmra.mxu0 %v159
  %v187 = vpop.f32.mrf.mxu0
  %v188 = vadd.f32 %v152, %v187
  %189 = vmatmul.f32.gmra.mxu0 %v162
  %v190 = vpop.f32.mrf.mxu0
  %v191 = vadd.f32 %v152, %v190
  %192 = vmatmul.f32.gmra.mxu0 %v165
  %v193 = vpop.f32.mrf.mxu0
  %v194 = vadd.f32 %v152, %v193
  %195 = vdwg.mxu0
  %v196 = vmax.f32 %v185, 0.0
  %v197 = vmax.f32 %v188, 0.0
  %v198 = vmax.f32 %v191, 0.0
  %v199 = vmax.f32 %v194, 0.0
  %v200 = vld [vmem:[%s4] sm:$0xff]
  %v201 = vld [vmem:[%s4 + $0x8] sm:$0xff]
  %v202 = vld [vmem:[%s4 + $0x10] sm:$0xff]
  %v203 = vld [vmem:[%s4 + $0x18] sm:$0xff]
  %v204 = vld [vmem:[%s8] sm:$0x1]
  %v206 = vperm.slane %v204, 0
  %v209 = vsel %vm154, %v196, 0
  %v212 = vsel %vm154, %v197, 0
  %v215 = vsel %vm154, %v198, 0
  %v218 = vsel %vm154, %v199, 0
  %220 = vmatpush.msra.mxu0 0.0
  %221 = vmatpush.msra.mxu0 0.0
  %222 = vmatpush.msra.mxu0 0.0
  %223 = vmatpush.msra.mxu0 0.0
  %224 = vmatpush.msra.mxu0 0.0
  %225 = vmatpush.msra.mxu0 0.0
  %226 = vmatpush.msra.mxu0 0.0
  %227 = vmatpush.msra.mxu0 0.0
  %228 = vmatpush.msra.mxu0 0.0
  %229 = vmatpush.msra.mxu0 0.0
  %230 = vmatpush.msra.mxu0 0.0
  %231 = vmatpush.msra.mxu0 0.0
  %232 = vmatpush.msra.mxu0 %v203
  %233 = vmatpush.msra.mxu0 %v202
  %234 = vmatpush.msra.mxu0 %v201
  %235 = vmatpush.msra.mxu0 %v200
  %236 = vmatmul.f32.gmra.mxu0 %v209
  %v237 = vpop.f32.mrf.mxu0
  %v238 = vadd.f32 %v206, %v237
  %239 = vmatmul.f32.gmra.mxu0 %v212
  %v240 = vpop.f32.mrf.mxu0
  %v241 = vadd.f32 %v206, %v240
  %242 = vmatmul.f32.gmra.mxu0 %v215
  %v243 = vpop.f32.mrf.mxu0
  %v244 = vadd.f32 %v206, %v243
  %245 = vmatmul.f32.gmra.mxu0 %v218
  %v246 = vpop.f32.mrf.mxu0
  %v247 = vadd.f32 %v206, %v246
  %248 = vdwg.mxu0
  %v249 = vmax.f32 %v238, 0.0
  %v250 = vmax.f32 %v241, 0.0
  %v251 = vmax.f32 %v244, 0.0
  %v252 = vmax.f32 %v247, 0.0
  %vm253 = vcmask 64512
  %254 = vst.msk [vmem:[%s9] sm:$0xff] %vm253, %v249
  %255 = vst.msk [vmem:[%s9 + $0x8] sm:$0xff] %vm253, %v250
  %256 = vst.msk [vmem:[%s9 + $0x10] sm:$0xff] %vm253, %v251
  %257 = vst.msk [vmem:[%s9 + $0x18] sm:$0xff] %vm253, %v252
  // Predicated region
  $region38: #{tpu_custom_call.1} parent=0 // pred_check
    _
  $region39: #{tpu_custom_call.1} parent=0 // pred_check_branch
    %259 = sbr.rel (0) target = $region41
  $region40: #{tpu_custom_call.1} parent=0 // pred_region
    _
  $region41: #{tpu_custom_call.1} parent=0 // pred_fallthru
    _
  // Predicated region
  $region42: #{tpu_custom_call.1} parent=0 // pred_check
    _
  $region43: #{tpu_custom_call.1} parent=0 // pred_check_branch
    %261 = sbr.rel (0) target = $region45
  $region44: #{tpu_custom_call.1} parent=0 // pred_region
    _
  $region45: #{tpu_custom_call.1} parent=0 // pred_fallthru
    _

</llo_original>
